<compile_context>
chip_gen: v7x
topology: tpu7x:2x2x1
jax: 0.10.0
libtpu: 0.0.40
codegen_flags: <defaults>
</compile_context>

<pallas_src>
import functools

import jax
import jax.numpy as jnp
from jax.experimental import pallas as pl
from jax.experimental.pallas import tpu as pltpu


def _round_up(x, m):
    return (x + m - 1) // m * m


def _acti_kernel(h, acti):
    """Activation used inside the Pallas kernel."""
    if acti == "relu":
        return jnp.maximum(h, 0.0)
    elif acti == "leakyrelu":
        return jnp.where(h >= 0.0, h, 0.01 * h)      # torch nn.LeakyReLU default slope
    elif acti == "softplus":
        return jnp.log1p(jnp.exp(-jnp.abs(h))) + jnp.maximum(h, 0.0)  # stable softplus
    elif acti == "sigmoid":
        # Exact reciprocal here: in-layer approx error would be amplified by the
        # following matmuls (perf-review correctness note).
        return 1.0 / (1.0 + jnp.exp(-h))
    raise ValueError(f"unknown activation: {acti}")


def _acti_ref(h, acti):
    """Pure-JAX activation for the reference implementation."""
    if acti == "relu":
        return jnp.maximum(h, 0.0)
    elif acti == "leakyrelu":
        return jnp.where(h >= 0.0, h, 0.01 * h)
    elif acti == "softplus":
        return jnp.log1p(jnp.exp(-jnp.abs(h))) + jnp.maximum(h, 0.0)
    elif acti == "sigmoid":
        return jax.nn.sigmoid(h)
    raise ValueError(f"unknown activation: {acti}")


def head_net_kernel(x_ref, wbd_ref, bt_ref, wfr_ref, bf_ref,
                    out_ref, sig_ref, *, num_layer, acti, pack):
    # x_ref   : [TBp, P*D]  lane-packed batch tile (each vector row holds P batch rows)
    # wbd_ref : [L, P*D, P*D] block-diagonal hidden weights ((in, out) layout)
    # bt_ref  : [L, 1, P*D]   lane-tiled hidden biases
    # wfr_ref : [8, P*D]      final weight, pre-broadcast as `pack` block rows
    # bf_ref  : [1, 1]        final bias
    # out_ref, sig_ref : [P, TBp]  transposed, lane-dense outputs
    h = x_ref[...]
    cdt = h.dtype                                     # compute dtype (f32 or bf16)
    for l in range(num_layer):                        # small static L -> unrolled
        h = jnp.dot(h, wbd_ref[l], preferred_element_type=jnp.float32) + bt_ref[l]
        h = _acti_kernel(h, acti).astype(cdt)

    # Final Linear(D, 1) for all `pack` packed columns at once, emitted transposed:
    #   y_t[j, r] = sum_d wfr[j, d] * h[r, d] = wf . x_batch[P*r + j]
    # (NT dot_general with the small operand on the left; result is lane-dense.)
    y_t = jax.lax.dot_general(
        wfr_ref[...], h,
        dimension_numbers=(((1,), (1,)), ((), ())),
        preferred_element_type=jnp.float32,
    )[0:pack, :] + bf_ref[...]                        # (1,1) broadcasts over (P, TBp)

    out_ref[...] = y_t.astype(out_ref.dtype)
    # Returned sigmoid uses the approximate EUP reciprocal (free slot); tolerance
    # on this output is documented/loosened in the checks below.
    sig_ref[...] = pl.reciprocal(1.0 + jnp.exp(-y_t), approx=True).astype(sig_ref.dtype)


def head_net_forward(x, w_hidden, b_hidden, w_final, b_final, *,
                     num_layer, acti, tile_b=8192, use_bf16=False):
    """Pallas forward of head_net. Returns (logits [B,1], sigmoid(logits) [B,1])."""
    B, D = x.shape
    assert num_layer >= 1
    assert w_hidden.shape == (num_layer, D, D)
    assert b_hidden.shape == (num_layer, 1, D)
    assert w_final.shape == (1, D)
    assert b_final.shape == (1, 1)

    # ---- lane packing: P batch rows side-by-side on the 128-lane axis -------------
    P = min(8, 128 // D) if (D <= 128 and 128 % D == 0) else 1
    PD = P * D

    Bp = _round_up(B, P)
    if Bp != B:                                       # pad batch to a multiple of P
        x = jnp.pad(x, ((0, Bp - B), (0, 0)))
    Brows = Bp // P
    x_p = x.reshape(Brows, PD)                        # free row-major reshape

    # Block-diagonal hidden weights / lane-tiled biases (packed columns independent).
    w_bd = jnp.zeros((num_layer, PD, PD), w_hidden.dtype)
    for j in range(P):
        w_bd = w_bd.at[:, j * D:(j + 1) * D, j * D:(j + 1) * D].set(w_hidden)
    b_t = jnp.tile(b_hidden, (1, 1, P))               # (L, 1, PD)

    # Final weight pre-laid-out as `P` block rows of an (8, PD) matrix (no in-kernel
    # broadcast; the NT matmul emits the transposed lane-dense result directly).
    wf_rows = jnp.zeros((8, PD), w_final.dtype)
    for j in range(P):
        wf_rows = wf_rows.at[j, j * D:(j + 1) * D].set(w_final[0])

    cdt = jnp.bfloat16 if use_bf16 else x_p.dtype
    x_p = x_p.astype(cdt)
    w_bd = w_bd.astype(cdt)
    b_t = b_t.astype(cdt)
    wf_rows = wf_rows.astype(cdt)
    bf = b_final.astype(jnp.float32)

    # ---- batch tiling (packed rows) ------------------------------------------------
    max_tbp = max(128, tile_b // P)
    if Brows <= 128:
        tb_p = Brows                                  # single full-array block
    else:
        # >= 2 grid steps (v7x megacore), capped at max_tbp, multiple of 128 so the
        # (tb_p, PD) / (P, tb_p) blocks satisfy the (8, 128) divisibility rule.
        tb_p = min(max_tbp, _round_up(pl.cdiv(Brows, 2), 128))
    grid = (pl.cdiv(Brows, tb_p),)

    kernel = functools.partial(head_net_kernel, num_layer=num_layer, acti=acti, pack=P)
    out_t, sig_t = pl.pallas_call(
        kernel,
        grid=grid,
        in_specs=[
            pl.BlockSpec((tb_p, PD), lambda i: (i, 0)),              # streamed batch tile
            pl.BlockSpec((num_layer, PD, PD), lambda i: (0, 0, 0)),  # resident hidden W
            pl.BlockSpec((num_layer, 1, PD), lambda i: (0, 0, 0)),   # resident hidden b
            pl.BlockSpec((8, PD), lambda i: (0, 0)),                 # resident final W rows
            pl.BlockSpec((1, 1), lambda i: (0, 0)),                  # resident final b
        ],
        out_specs=(
            pl.BlockSpec((P, tb_p), lambda i: (0, i)),               # lane-dense logits^T
            pl.BlockSpec((P, tb_p), lambda i: (0, i)),               # lane-dense sigmoid^T
        ),
        out_shape=(
            jax.ShapeDtypeStruct((P, Brows), jnp.float32),
            jax.ShapeDtypeStruct((P, Brows), jnp.float32),
        ),
        compiler_params=pltpu.CompilerParams(
            dimension_semantics=("parallel",),   # independent batch tiles -> megacore
        ),
    )(x_p, w_bd, b_t, wf_rows, bf)

    # (P, Brows) -> (B, 1): transpose+reshape of a tiny (4*B-byte) array in the wrapper.
    logits = out_t.T.reshape(Bp, 1)[:B]
    sig = sig_t.T.reshape(Bp, 1)[:B]
    return logits, sig


def _ref_forward(x, w_hidden, b_hidden, w_final, b_final, *, num_layer, acti):
    # Pure-JAX reference mirroring the torch module.
    h = x.astype(jnp.float32)
    for l in range(num_layer):
        h = h @ w_hidden[l] + b_hidden[l]
        h = _acti_ref(h, acti)
    y = h @ w_final.T + b_final
    return y, jax.nn.sigmoid(y)


if __name__ == "__main__":
    num_layer = 2
    rep_dim = 32

    key = jax.random.PRNGKey(0)
    kx, kw, kb, kwf, kbf, kx2, kx3 = jax.random.split(key, 7)

    # Parameters (torch.nn.Linear semantics; hidden weights stored transposed as (in, out)).
    w_hidden = 0.1 * jax.random.normal(kw, (num_layer, rep_dim, rep_dim), dtype=jnp.float32)
    b_hidden = 0.1 * jax.random.normal(kb, (num_layer, 1, rep_dim), dtype=jnp.float32)
    w_final = 0.1 * jax.random.normal(kwf, (1, rep_dim), dtype=jnp.float32)   # [1, rep_dim]
    b_final = 0.1 * jax.random.normal(kbf, (1, 1), dtype=jnp.float32)

    # --- small batch, all activations (single grid step, full-array blocks) ---
    batch = 8
    x = jax.random.normal(kx, (batch, rep_dim), dtype=jnp.float32)
    for acti in ("relu", "leakyrelu", "softplus", "sigmoid"):
        out, sig = head_net_forward(x, w_hidden, b_hidden, w_final, b_final,
                                    num_layer=num_layer, acti=acti)
        jax.block_until_ready((out, sig))
        ref_out, ref_sig = _ref_forward(x, w_hidden, b_hidden, w_final, b_final,
                                        num_layer=num_layer, acti=acti)
        assert out.shape == (batch, 1) and sig.shape == (batch, 1)
        assert jnp.allclose(out, ref_out, atol=1e-5, rtol=1e-5), acti
        # Returned sigmoid uses the approximate EUP reciprocal -> looser tolerance.
        assert jnp.allclose(sig, ref_sig, atol=2e-3, rtol=2e-3), acti

    # --- batch not a multiple of the pack factor (exercises zero-padding path) ---
    batch3 = 6
    x3 = jax.random.normal(kx3, (batch3, rep_dim), dtype=jnp.float32)
    out3, sig3 = head_net_forward(x3, w_hidden, b_hidden, w_final, b_final,
                                  num_layer=num_layer, acti="relu")
    jax.block_until_ready((out3, sig3))
    ref_out3, ref_sig3 = _ref_forward(x3, w_hidden, b_hidden, w_final, b_final,
                                      num_layer=num_layer, acti="relu")
    assert out3.shape == (batch3, 1) and sig3.shape == (batch3, 1)
    assert jnp.allclose(out3, ref_out3, atol=1e-5, rtol=1e-5)
    assert jnp.allclose(sig3, ref_sig3, atol=2e-3, rtol=2e-3)

    # --- large batch: multi-step grid (>=2 tiles for v7x megacore) incl. partial tile ---
    batch2 = 4100
    x2 = jax.random.normal(kx2, (batch2, rep_dim), dtype=jnp.float32)
    out2, sig2 = head_net_forward(x2, w_hidden, b_hidden, w_final, b_final,
                                  num_layer=num_layer, acti="relu", tile_b=8192)
    jax.block_until_ready((out2, sig2))
    ref_out2, ref_sig2 = _ref_forward(x2, w_hidden, b_hidden, w_final, b_final,
                                      num_layer=num_layer, acti="relu")
    assert out2.shape == (batch2, 1) and sig2.shape == (batch2, 1)
    assert jnp.allclose(out2, ref_out2, atol=1e-5, rtol=1e-5)
    assert jnp.allclose(sig2, ref_sig2, atol=2e-3, rtol=2e-3)

    # --- optional bf16-operand path (f32 MXU accumulation); loose sanity tolerance ---
    out_b, sig_b = head_net_forward(x2, w_hidden, b_hidden, w_final, b_final,
                                    num_layer=num_layer, acti="relu", use_bf16=True)
    jax.block_until_ready((out_b, sig_b))
    assert out_b.shape == (batch2, 1) and sig_b.shape == (batch2, 1)
    assert jnp.allclose(out_b, ref_out2, atol=1e-1, rtol=1e-1)

    print("KERNEL_OK")
</pallas_src>

<mosaic_0001>
module attributes {stable_mosaic.version = 11 : i64} {
  func.func @head_net_kernel(%arg0: i32, %arg1: memref<2x128xf32, #tpu.memory_space<vmem>>, %arg2: memref<2x128x128xf32, #tpu.memory_space<vmem>>, %arg3: memref<2x1x128xf32, #tpu.memory_space<vmem>>, %arg4: memref<8x128xf32, #tpu.memory_space<vmem>>, %arg5: memref<1x1xf32, #tpu.memory_space<vmem>>, %arg6: memref<4x2xf32, #tpu.memory_space<vmem>>, %arg7: memref<4x2xf32, #tpu.memory_space<vmem>>) attributes {dimension_semantics = [#tpu.dimension_semantics<parallel>], iteration_bounds = array<i64: 1>, scalar_prefetch = 0 : i64, scratch_operands = 0 : i64, tpu.core_type = #tpu.core_type<tc>, window_params = [{transform_indices = @transform_0, window_bounds = array<i64: 2, 128>}, {pipeline_mode = #tpu.pipeline_mode<synchronous>, transform_indices = @transform_1, window_bounds = array<i64: 2, 128, 128>}, {pipeline_mode = #tpu.pipeline_mode<synchronous>, transform_indices = @transform_2, window_bounds = array<i64: 2, 1, 128>}, {pipeline_mode = #tpu.pipeline_mode<synchronous>, transform_indices = @transform_3, window_bounds = array<i64: 8, 128>}, {pipeline_mode = #tpu.pipeline_mode<synchronous>, transform_indices = @transform_4, window_bounds = array<i64: 1, 1>}, {transform_indices = @transform_5, window_bounds = array<i64: 4, 2>}, {transform_indices = @transform_6, window_bounds = array<i64: 4, 2>}]} {
    %c0 = arith.constant 0 : index
    %c0_0 = arith.constant 0 : index
    %0 = vector.load %arg1[%c0, %c0_0] : memref<2x128xf32, #tpu.memory_space<vmem>>, vector<2x128xf32>
    %c0_1 = arith.constant 0 : index
    %c0_2 = arith.constant 0 : index
    %c0_3 = arith.constant 0 : index
    %1 = vector.load %arg2[%c0_1, %c0_2, %c0_3] : memref<2x128x128xf32, #tpu.memory_space<vmem>>, vector<1x128x128xf32>
    %2 = vector.shape_cast %1 : vector<1x128x128xf32> to vector<128x128xf32>
    %cst = arith.constant dense<0.000000e+00> : vector<2x128xf32>
    %3 = tpu.matmul %0, %2, %cst {dimension_numbers = #tpu.dot_dimension_numbers<[1], [0], [0], [1], [0, 0, 1, 1], [], []>} : vector<2x128xf32>, vector<128x128xf32>, vector<2x128xf32> -> vector<2x128xf32>
    %c0_4 = arith.constant 0 : index
    %c0_5 = arith.constant 0 : index
    %c0_6 = arith.constant 0 : index
    %4 = vector.load %arg3[%c0_4, %c0_5, %c0_6] : memref<2x1x128xf32, #tpu.memory_space<vmem>>, vector<1x1x128xf32>
    %5 = vector.shape_cast %4 : vector<1x1x128xf32> to vector<1x128xf32>
    %6 = vector.broadcast %5 : vector<1x128xf32> to vector<2x128xf32>
    %7 = arith.addf %3, %6 : vector<2x128xf32>
    %cst_7 = arith.constant 0.000000e+00 : f32
    %8 = vector.broadcast %cst_7 : f32 to vector<2x128xf32>
    %9 = arith.maximumf %7, %8 : vector<2x128xf32>
    %c1 = arith.constant 1 : index
    %c0_8 = arith.constant 0 : index
    %c0_9 = arith.constant 0 : index
    %10 = vector.load %arg2[%c1, %c0_8, %c0_9] : memref<2x128x128xf32, #tpu.memory_space<vmem>>, vector<1x128x128xf32>
    %11 = vector.shape_cast %10 : vector<1x128x128xf32> to vector<128x128xf32>
    %cst_10 = arith.constant dense<0.000000e+00> : vector<2x128xf32>
    %12 = tpu.matmul %9, %11, %cst_10 {dimension_numbers = #tpu.dot_dimension_numbers<[1], [0], [0], [1], [0, 0, 1, 1], [], []>} : vector<2x128xf32>, vector<128x128xf32>, vector<2x128xf32> -> vector<2x128xf32>
    %c1_11 = arith.constant 1 : index
    %c0_12 = arith.constant 0 : index
    %c0_13 = arith.constant 0 : index
    %13 = vector.load %arg3[%c1_11, %c0_12, %c0_13] : memref<2x1x128xf32, #tpu.memory_space<vmem>>, vector<1x1x128xf32>
    %14 = vector.shape_cast %13 : vector<1x1x128xf32> to vector<1x128xf32>
    %15 = vector.broadcast %14 : vector<1x128xf32> to vector<2x128xf32>
    %16 = arith.addf %12, %15 : vector<2x128xf32>
    %cst_14 = arith.constant 0.000000e+00 : f32
    %17 = vector.broadcast %cst_14 : f32 to vector<2x128xf32>
    %18 = arith.maximumf %16, %17 : vector<2x128xf32>
    %c0_15 = arith.constant 0 : index
    %c0_16 = arith.constant 0 : index
    %19 = vector.load %arg4[%c0_15, %c0_16] : memref<8x128xf32, #tpu.memory_space<vmem>>, vector<8x128xf32>
    %cst_17 = arith.constant dense<0.000000e+00> : vector<8x2xf32>
    %20 = tpu.matmul %19, %18, %cst_17 {dimension_numbers = #tpu.dot_dimension_numbers<[1], [1], [0], [0], [0, 0, 1, 0], [], []>} : vector<8x128xf32>, vector<2x128xf32>, vector<8x2xf32> -> vector<8x2xf32>
    %21 = vector.extract_strided_slice %20 {offsets = [0, 0], sizes = [4, 2], strides = [1, 1]} : vector<8x2xf32> to vector<4x2xf32>
    %c0_18 = arith.constant 0 : index
    %c0_19 = arith.constant 0 : index
    %22 = vector.load %arg5[%c0_18, %c0_19] : memref<1x1xf32, #tpu.memory_space<vmem>>, vector<1x1xf32>
    %23 = vector.broadcast %22 : vector<1x1xf32> to vector<4x2xf32>
    %24 = arith.addf %21, %23 : vector<4x2xf32>
    %c0_20 = arith.constant 0 : index
    %c0_21 = arith.constant 0 : index
    %25 = vector.load %arg6[%c0_20, %c0_21] : memref<4x2xf32, #tpu.memory_space<vmem>>, vector<4x2xf32>
    tpu.vector_store %arg6[%c0_20, %c0_21], %24 {strides = array<i32>} : memref<4x2xf32, #tpu.memory_space<vmem>>, vector<4x2xf32>,
    %cst_22 = arith.constant 0.000000e+00 : f32
    %26 = vector.broadcast %cst_22 : f32 to vector<4x2xf32>
    %27 = arith.subf %26, %24 : vector<4x2xf32>
    %28 = math.exp %27 : vector<4x2xf32>
    %cst_23 = arith.constant 1.000000e+00 : f32
    %29 = vector.broadcast %cst_23 : f32 to vector<4x2xf32>
    %30 = arith.addf %29, %28 : vector<4x2xf32>
    %31 = tpu.reciprocal %30 {approx = true} : vector<4x2xf32> -> vector<4x2xf32>
    %c0_24 = arith.constant 0 : index
    %c0_25 = arith.constant 0 : index
    %32 = vector.load %arg7[%c0_24, %c0_25] : memref<4x2xf32, #tpu.memory_space<vmem>>, vector<4x2xf32>
    tpu.vector_store %arg7[%c0_24, %c0_25], %31 {strides = array<i32>} : memref<4x2xf32, #tpu.memory_space<vmem>>, vector<4x2xf32>,
    return
  }
  func.func @transform_0(%arg0: i32) -> (i32, i32) {
    %c0_i32 = arith.constant 0 : i32
    %c0_i32_0 = arith.constant 0 : i32
    return %arg0, %c0_i32 : i32, i32
  }
  func.func @transform_1(%arg0: i32) -> (i32, i32, i32) {
    %c0_i32 = arith.constant 0 : i32
    %c0_i32_0 = arith.constant 0 : i32
    %c0_i32_1 = arith.constant 0 : i32
    %c0_i32_2 = arith.constant 0 : i32
    return %c0_i32, %c0_i32_0, %c0_i32_1 : i32, i32, i32
  }
  func.func @transform_2(%arg0: i32) -> (i32, i32, i32) {
    %c0_i32 = arith.constant 0 : i32
    %c0_i32_0 = arith.constant 0 : i32
    %c0_i32_1 = arith.constant 0 : i32
    %c0_i32_2 = arith.constant 0 : i32
    return %c0_i32, %c0_i32_0, %c0_i32_1 : i32, i32, i32
  }
  func.func @transform_3(%arg0: i32) -> (i32, i32) {
    %c0_i32 = arith.constant 0 : i32
    %c0_i32_0 = arith.constant 0 : i32
    %c0_i32_1 = arith.constant 0 : i32
    return %c0_i32, %c0_i32_0 : i32, i32
  }
  func.func @transform_4(%arg0: i32) -> (i32, i32) {
    %c0_i32 = arith.constant 0 : i32
    %c0_i32_0 = arith.constant 0 : i32
    %c0_i32_1 = arith.constant 0 : i32
    return %c0_i32, %c0_i32_0 : i32, i32
  }
  func.func @transform_5(%arg0: i32) -> (i32, i32) {
    %c0_i32 = arith.constant 0 : i32
    %c0_i32_0 = arith.constant 0 : i32
    return %c0_i32, %arg0 : i32, i32
  }
  func.func @transform_6(%arg0: i32) -> (i32, i32) {
    %c0_i32 = arith.constant 0 : i32
    %c0_i32_0 = arith.constant 0 : i32
    return %c0_i32, %arg0 : i32, i32
  }
}

</mosaic_0001>

<llo_original>
// kernel: tpu_custom_call.1
$region0: #{tpu_custom_call.1}
  #allocation0 [shape = 'u32[]', space=smem, size = 0x4, offset = 0x4, fixed_abs, tag = 'smem constant byte address 0x4 - core index']
  #allocation1 [shape = 'u32[144,128]{1,0:T(1,128)}', space=vmem, size = 0x12000, scoped, tag = 'internal scratch']
  #allocation2 [shape = 'f32[1,1]{1,0:T(1,128)S(1)}', space=vmem, size = 0x200, scoped, tag = 'scoped memory for tpu_custom_call.1']
  %s0 = inlined_call_operand.vmem [shape: f32[2,128], index: 0, kind: input, shape index: {}]
  %s1 = inlined_call_operand.hbm [shape: f32[2,128,128], index: 1, kind: input, shape index: {}]
  %s2 = inlined_call_operand.vmem [shape: f32[2,1,128], index: 2, kind: input, shape index: {}]
  %s3 = inlined_call_operand.vmem [shape: f32[8,128], index: 3, kind: input, shape index: {}]
  %s4 = inlined_call_operand.<no memory space> [shape: f32[1,1], index: 4, kind: input, shape index: {}]
  %s5 = inlined_call_operand.vmem [shape: f32[4,2], index: 5, kind: output, shape index: {0}]
  %s6 = inlined_call_operand.vmem [shape: f32[4,2], index: 6, kind: output, shape index: {1}]
  %7 = xla_tuple %s5, %s6
  %s8 = sld [smem:[#allocation0]]
  $region42: #{tpu_custom_call.1} parent=0
    _
  %s10 = ssub.s32 1, %s8
  %s11 = scalar_select 0, %s10, %s8
  %v12 = vstv %s4
  %13 = vst [vmem:[#allocation2] sm:$0x1] %v12
  $region1: #{tpu_custom_call.1} parent=0
    #allocation3 [shape = 'u8[131072]{0}', space=vmem, size = 0x20000, scoped, tag = 'input window, operand 1, single buffered']
    #allocation4 [shape = 's32[1]{0}', space=sflag, size = 0x4, scoped, tag = 'scoped memory for tpu_custom_call.1']
    %14 = vsyncpa [#allocation4], 0
    // Predicated region
    $region2: #{tpu_custom_call.1} parent=1 // pred_check
      _
    $region3: #{tpu_custom_call.1} parent=1 // pred_check_branch
      %16 = sbr.rel (0) target = $region5
    $region4: #{tpu_custom_call.1} parent=1 // pred_region
      _
    $region5: #{tpu_custom_call.1} parent=1 // pred_fallthru
      _
    // Predicated region
    $region6: #{tpu_custom_call.1} parent=1 // pred_check
      _
    $region7: #{tpu_custom_call.1} parent=1 // pred_check_branch
      %18 = sbr.rel (0) target = $region9
    $region8: #{tpu_custom_call.1} parent=1 // pred_region
      %s20 = ssub.s32 4096, 4096
      %21 = vsyncadd [#allocation4], %s20
      %s22 = sshll.u32 [#allocation3], 4
      %s23 = int_to_ptr.vmem [resolvable:$true] %s22
      %28 = dma.hbm_to_vmem [thread:$0]  %s1, 4096, %s23, [#allocation4], 128, 128, 8
    $region9: #{tpu_custom_call.1} parent=1 // pred_fallthru
      _
    // Predicated region
    $region10: #{tpu_custom_call.1} parent=1 // pred_check
      _
    $region11: #{tpu_custom_call.1} parent=1 // pred_check_branch
      %30 = sbr.rel (0) target = $region13
    $region12: #{tpu_custom_call.1} parent=1 // pred_region
      _
    $region13: #{tpu_custom_call.1} parent=1 // pred_fallthru
      _
    // Predicated region
    $region14: #{tpu_custom_call.1} parent=1 // pred_check
      _
    $region15: #{tpu_custom_call.1} parent=1 // pred_check_branch
      %32 = sbr.rel (0) target = $region17
    $region16: #{tpu_custom_call.1} parent=1 // pred_region
      _
    $region17: #{tpu_custom_call.1} parent=1 // pred_fallthru
      _
    // Predicated region
    $region18: #{tpu_custom_call.1} parent=1 // pred_check
      _
    $region19: #{tpu_custom_call.1} parent=1 // pred_check_branch
      %34 = sbr.rel (0) target = $region21
    $region20: #{tpu_custom_call.1} parent=1 // pred_region
      _
    $region21: #{tpu_custom_call.1} parent=1 // pred_fallthru
      _
    // Predicated region
    $region22: #{tpu_custom_call.1} parent=1 // pred_check
      _
    $region23: #{tpu_custom_call.1} parent=1 // pred_check_branch
      %36 = sbr.rel (0) target = $region25
    $region24: #{tpu_custom_call.1} parent=1 // pred_region
      %37 = dma.done [#allocation4], 4096
    $region25: #{tpu_custom_call.1} parent=1 // pred_fallthru
      _
    %v38 = vld [vmem:[%s0] sm:$0x3]
    %v39 = vld [vmem:[#allocation3] sm:$0xff]
    %v40 = vld [vmem:[#allocation3 + $0x8] sm:$0xff]
    %v41 = vld [vmem:[#allocation3 + $0x10] sm:$0xff]
    %v42 = vld [vmem:[#allocation3 + $0x18] sm:$0xff]
    %v43 = vld [vmem:[#allocation3 + $0x20] sm:$0xff]
    %v44 = vld [vmem:[#allocation3 + $0x28] sm:$0xff]
    %v45 = vld [vmem:[#allocation3 + $0x30] sm:$0xff]
    %v46 = vld [vmem:[#allocation3 + $0x38] sm:$0xff]
    %v47 = vld [vmem:[#allocation3 + $0x40] sm:$0xff]
    %v48 = vld [vmem:[#allocation3 + $0x48] sm:$0xff]
    %v49 = vld [vmem:[#allocation3 + $0x50] sm:$0xff]
    %v50 = vld [vmem:[#allocation3 + $0x58] sm:$0xff]
    %v51 = vld [vmem:[#allocation3 + $0x60] sm:$0xff]
    %v52 = vld [vmem:[#allocation3 + $0x68] sm:$0xff]
    %v53 = vld [vmem:[#allocation3 + $0x70] sm:$0xff]
    %v54 = vld [vmem:[#allocation3 + $0x78] sm:$0xff]
    %v55 = vld [vmem:[%s2] sm:$0x1]
    %v57 = vlaneseq
    %v58 = vshrl.u32 %v57, 7
    %v59 = vsub.s32 0, %v58
    %v60 = vrot.slane %v55, %v59
    %62 = vmatprep.subr.mxu0 0.0
    %63 = vmatpush1.msra.mxu0 %v39
    %64 = vmatprep.subr.mxu0 0.0
    %65 = vmatpush1.msra.mxu0 %v40
    %66 = vmatprep.subr.mxu0 0.0
    %67 = vmatpush1.msra.mxu0 %v41
    %68 = vmatprep.subr.mxu0 0.0
    %69 = vmatpush1.msra.mxu0 %v42
    %70 = vmatprep.subr.mxu0 0.0
    %71 = vmatpush1.msra.mxu0 %v43
    %72 = vmatprep.subr.mxu0 0.0
    %73 = vmatpush1.msra.mxu0 %v44
    %74 = vmatprep.subr.mxu0 0.0
    %75 = vmatpush1.msra.mxu0 %v45
    %76 = vmatprep.subr.mxu0 0.0
    %77 = vmatpush1.msra.mxu0 %v46
    %78 = vmatprep.subr.mxu0 0.0
    %79 = vmatpush1.msra.mxu0 %v47
    %80 = vmatprep.subr.mxu0 0.0
    %81 = vmatpush1.msra.mxu0 %v48
    %82 = vmatprep.subr.mxu0 0.0
    %83 = vmatpush1.msra.mxu0 %v49
    %84 = vmatprep.subr.mxu0 0.0
    %85 = vmatpush1.msra.mxu0 %v50
    %86 = vmatprep.subr.mxu0 0.0
    %87 = vmatpush1.msra.mxu0 %v51
    %88 = vmatprep.subr.mxu0 0.0
    %89 = vmatpush1.msra.mxu0 %v52
    %90 = vmatprep.subr.mxu0 0.0
    %91 = vmatpush1.msra.mxu0 %v53
    %92 = vmatprep.subr.mxu0 0.0
    %93 = vmatpush1.msra.mxu0 %v54
    %94 = vmatprep.subr.mxu0 0.0
    %95 = vmatpush1.msra.mxu0 0.0
    %96 = vmatprep.subr.mxu0 0.0
    %97 = vmatpush1.msra.mxu0 0.0
    %98 = vmatprep.subr.mxu0 0.0
    %99 = vmatpush1.msra.mxu0 0.0
    %100 = vmatprep.subr.mxu0 0.0
    %101 = vmatpush1.msra.mxu0 0.0
    %102 = vmatprep.subr.mxu0 0.0
    %103 = vmatpush1.msra.mxu0 0.0
    %104 = vmatprep.subr.mxu0 0.0
    %105 = vmatpush1.msra.mxu0 0.0
    %106 = vmatprep.subr.mxu0 0.0
    %107 = vmatpush1.msra.mxu0 0.0
    %108 = vmatprep.subr.mxu0 0.0
    %109 = vmatpush1.msra.mxu0 0.0
    %110 = vmatprep.subr.mxu0 0.0
    %111 = vmatpush1.msra.mxu0 0.0
    %112 = vmatprep.subr.mxu0 0.0
    %113 = vmatpush1.msra.mxu0 0.0
    %114 = vmatprep.subr.mxu0 0.0
    %115 = vmatpush1.msra.mxu0 0.0
    %116 = vmatprep.subr.mxu0 0.0
    %117 = vmatpush1.msra.mxu0 0.0
    %118 = vmatprep.subr.mxu0 0.0
    %119 = vmatpush1.msra.mxu0 0.0
    %120 = vmatprep.subr.mxu0 0.0
    %121 = vmatpush1.msra.mxu0 0.0
    %122 = vmatprep.subr.mxu0 0.0
    %123 = vmatpush1.msra.mxu0 0.0
    %124 = vmatprep.subr.mxu0 0.0
    %125 = vmatpush1.msra.mxu0 0.0
    %126 = vmatprep.mubr.f32.mxu0 0.0
    %127 = vmatmul.mubr.f32.gmra.mrb[0].mxu0 %v38
    %v128 = vpop.f32.mrb[0].mxu0
    %v129 = vadd.f32 %v60, %v128
    %v130 = vpop.f32.mrb[0].mxu0
    %131 = vdwg.mxu0
    %v132 = vmax.f32 %v129, 0.0
    %s133 = scalar_lea.vmem [#allocation3], 128
    %v134 = vld [vmem:[%s133] sm:$0xff]
    %v135 = vld [vmem:[%s133 + $0x8] sm:$0xff]
    %v136 = vld [vmem:[%s133 + $0x10] sm:$0xff]
    %v137 = vld [vmem:[%s133 + $0x18] sm:$0xff]
    %v138 = vld [vmem:[%s133 + $0x20] sm:$0xff]
    %v139 = vld [vmem:[%s133 + $0x28] sm:$0xff]
    %v140 = vld [vmem:[%s133 + $0x30] sm:$0xff]
    %v141 = vld [vmem:[%s133 + $0x38] sm:$0xff]
    %v142 = vld [vmem:[%s133 + $0x40] sm:$0xff]
    %v143 = vld [vmem:[%s133 + $0x48] sm:$0xff]
    %v144 = vld [vmem:[%s133 + $0x50] sm:$0xff]
    %v145 = vld [vmem:[%s133 + $0x58] sm:$0xff]
    %v146 = vld [vmem:[%s133 + $0x60] sm:$0xff]
    %v147 = vld [vmem:[%s133 + $0x68] sm:$0xff]
    %v148 = vld [vmem:[%s133 + $0x70] sm:$0xff]
    %v149 = vld [vmem:[%s133 + $0x78] sm:$0xff]
    %s150 = scalar_lea.vmem %s2, 1
    %v151 = vld [vmem:[%s150] sm:$0x1]
    %v153 = vlaneseq
    %v154 = vshrl.u32 %v153, 7
    %v155 = vsub.s32 0, %v154
    %v156 = vrot.slane %v151, %v155
    %158 = vmatprep.subr.mxu0 0.0
    %159 = vmatpush1.msra.mxu0 %v134
    %160 = vmatprep.subr.mxu0 0.0
    %161 = vmatpush1.msra.mxu0 %v135
    %162 = vmatprep.subr.mxu0 0.0
    %163 = vmatpush1.msra.mxu0 %v136
    %164 = vmatprep.subr.mxu0 0.0
    %165 = vmatpush1.msra.mxu0 %v137
    %166 = vmatprep.subr.mxu0 0.0
    %167 = vmatpush1.msra.mxu0 %v138
    %168 = vmatprep.subr.mxu0 0.0
    %169 = vmatpush1.msra.mxu0 %v139
    %170 = vmatprep.subr.mxu0 0.0
    %171 = vmatpush1.msra.mxu0 %v140
    %172 = vmatprep.subr.mxu0 0.0
    %173 = vmatpush1.msra.mxu0 %v141
    %174 = vmatprep.subr.mxu0 0.0
    %175 = vmatpush1.msra.mxu0 %v142
    %176 = vmatprep.subr.mxu0 0.0
    %177 = vmatpush1.msra.mxu0 %v143
    %178 = vmatprep.subr.mxu0 0.0
    %179 = vmatpush1.msra.mxu0 %v144
    %180 = vmatprep.subr.mxu0 0.0
    %181 = vmatpush1.msra.mxu0 %v145
    %182 = vmatprep.subr.mxu0 0.0
    %183 = vmatpush1.msra.mxu0 %v146
    %184 = vmatprep.subr.mxu0 0.0
    %185 = vmatpush1.msra.mxu0 %v147
    %186 = vmatprep.subr.mxu0 0.0
    %187 = vmatpush1.msra.mxu0 %v148
    %188 = vmatprep.subr.mxu0 0.0
    %189 = vmatpush1.msra.mxu0 %v149
    %190 = vmatprep.subr.mxu0 0.0
    %191 = vmatpush1.msra.mxu0 0.0
    %192 = vmatprep.subr.mxu0 0.0
    %193 = vmatpush1.msra.mxu0 0.0
    %194 = vmatprep.subr.mxu0 0.0
    %195 = vmatpush1.msra.mxu0 0.0
    %196 = vmatprep.subr.mxu0 0.0
    %197 = vmatpush1.msra.mxu0 0.0
    %198 = vmatprep.subr.mxu0 0.0
    %199 = vmatpush1.msra.mxu0 0.0
    %200 = vmatprep.subr.mxu0 0.0
    %201 = vmatpush1.msra.mxu0 0.0
    %202 = vmatprep.subr.mxu0 0.0
    %203 = vmatpush1.msra.mxu0 0.0
    %204 = vmatprep.subr.mxu0 0.0
    %205 = vmatpush1.msra.mxu0 0.0
    %206 = vmatprep.subr.mxu0 0.0
    %207 = vmatpush1.msra.mxu0 0.0
    %208 = vmatprep.subr.mxu0 0.0
    %209 = vmatpush1.msra.mxu0 0.0
    %210 = vmatprep.subr.mxu0 0.0
    %211 = vmatpush1.msra.mxu0 0.0
    %212 = vmatprep.subr.mxu0 0.0
    %213 = vmatpush1.msra.mxu0 0.0
    %214 = vmatprep.subr.mxu0 0.0
    %215 = vmatpush1.msra.mxu0 0.0
    %216 = vmatprep.subr.mxu0 0.0
    %217 = vmatpush1.msra.mxu0 0.0
    %218 = vmatprep.subr.mxu0 0.0
    %219 = vmatpush1.msra.mxu0 0.0
    %220 = vmatprep.subr.mxu0 0.0
    %221 = vmatpush1.msra.mxu0 0.0
    %222 = vmatprep.mubr.f32.mxu0 0.0
    %223 = vmatmul.mubr.f32.gmra.mrb[0].mxu0 %v132
    %v224 = vpop.f32.mrb[0].mxu0
    %v225 = vadd.f32 %v156, %v224
    %v226 = vpop.f32.mrb[0].mxu0
    %227 = vdwg.mxu0
    %v228 = vmax.f32 %v225, 0.0
    %v229 = vld [vmem:[%s3] sm:$0xff]
    %230 = vmatprep.subr.mxu0 0.0
    %231 = vmatpush1.xpose.msra.mxu0 %v228
    %232 = vmatprep.subr.mxu0 0.0
    %233 = vmatpush1.xpose.msra.mxu0 0.0
    %234 = vmatprep.subr.mxu0 0.0
    %235 = vmatpush1.xpose.msra.mxu0 0.0
    %236 = vmatprep.subr.mxu0 0.0
    %237 = vmatpush1.xpose.msra.mxu0 0.0
    %238 = vmatprep.subr.mxu0 0.0
    %239 = vmatpush1.xpose.msra.mxu0 0.0
    %240 = vmatprep.subr.mxu0 0.0
    %241 = vmatpush1.xpose.msra.mxu0 0.0
    %242 = vmatprep.subr.mxu0 0.0
    %243 = vmatpush1.xpose.msra.mxu0 0.0
    %244 = vmatprep.subr.mxu0 0.0
    %245 = vmatpush1.xpose.msra.mxu0 0.0
    %246 = vmatprep.subr.mxu0 0.0
    %247 = vmatpush1.xpose.msra.mxu0 0.0
    %248 = vmatprep.subr.mxu0 0.0
    %249 = vmatpush1.xpose.msra.mxu0 0.0
    %250 = vmatprep.subr.mxu0 0.0
    %251 = vmatpush1.xpose.msra.mxu0 0.0
    %252 = vmatprep.subr.mxu0 0.0
    %253 = vmatpush1.xpose.msra.mxu0 0.0
    %254 = vmatprep.subr.mxu0 0.0
    %255 = vmatpush1.xpose.msra.mxu0 0.0
    %256 = vmatprep.subr.mxu0 0.0
    %257 = vmatpush1.xpose.msra.mxu0 0.0
    %258 = vmatprep.subr.mxu0 0.0
    %259 = vmatpush1.xpose.msra.mxu0 0.0
    %260 = vmatprep.subr.mxu0 0.0
    %261 = vmatpush1.xpose.msra.mxu0 0.0
    %262 = vmatprep.subr.mxu0 0.0
    %263 = vmatpush1.xpose.msra.mxu0 0.0
    %264 = vmatprep.subr.mxu0 0.0
    %265 = vmatpush1.xpose.msra.mxu0 0.0
    %266 = vmatprep.subr.mxu0 0.0
    %267 = vmatpush1.xpose.msra.mxu0 0.0
    %268 = vmatprep.subr.mxu0 0.0
    %269 = vmatpush1.xpose.msra.mxu0 0.0
    %270 = vmatprep.subr.mxu0 0.0
    %271 = vmatpush1.xpose.msra.mxu0 0.0
    %272 = vmatprep.subr.mxu0 0.0
    %273 = vmatpush1.xpose.msra.mxu0 0.0
    %274 = vmatprep.subr.mxu0 0.0
    %275 = vmatpush1.xpose.msra.mxu0 0.0
    %276 = vmatprep.subr.mxu0 0.0
    %277 = vmatpush1.xpose.msra.mxu0 0.0
    %278 = vmatprep.subr.mxu0 0.0
    %279 = vmatpush1.xpose.msra.mxu0 0.0
    %280 = vmatprep.subr.mxu0 0.0
    %281 = vmatpush1.xpose.msra.mxu0 0.0
    %282 = vmatprep.subr.mxu0 0.0
    %283 = vmatpush1.xpose.msra.mxu0 0.0
    %284 = vmatprep.subr.mxu0 0.0
    %285 = vmatpush1.xpose.msra.mxu0 0.0
    %286 = vmatprep.subr.mxu0 0.0
    %287 = vmatpush1.xpose.msra.mxu0 0.0
    %288 = vmatprep.subr.mxu0 0.0
    %289 = vmatpush1.xpose.msra.mxu0 0.0
    %290 = vmatprep.subr.mxu0 0.0
    %291 = vmatpush1.xpose.msra.mxu0 0.0
    %292 = vmatprep.subr.mxu0 0.0
    %293 = vmatpush1.xpose.msra.mxu0 0.0
    %294 = vmatprep.mubr.f32.mxu0 0.0
    %295 = vmatmul.mubr.f32.gmra.mrb[0].mxu0 %v229
    %v296 = vpop.f32.mrb[0].mxu0
    %v297 = vadd.f32 0.0, %v296
    %v298 = vpop.f32.mrb[0].mxu0
    %299 = vdwg.mxu0
    %v300 = vld [vmem:[#allocation2] sm:$0x1]
    %v302 = vlaneseq
    %v303 = vshrl.u32 %v302, 7
    %v304 = vsub.s32 0, %v303
    %v305 = vrot.slane %v300, %v304
    %306 = vset.pattern.permute.xlu0 0
    %307 = vperm.xlu0 %306, %v305
    %v308 = vpop.permute.xlu0 %307
    %v310 = vadd.f32 %v297, %v308
    %vm311 = vcmask 11264
    %312 = vst.msk [vmem:[%s5] sm:$0xf] %vm311, %v310
    %v313 = vsub.f32 0.0, %v310
    %v314 = vmul.f32 %v313, 1.442695
    %v315 = vpow.pop %v314
    %v316 = vadd.f32 %v315, 1.0
    %v317 = vrcp.pop %v316
    %318 = vst.msk [vmem:[%s6] sm:$0xf] %vm311, %v317
    // Predicated region
    $region26: #{tpu_custom_call.1} parent=1 // pred_check
      _
    $region27: #{tpu_custom_call.1} parent=1 // pred_check_branch
      %320 = sbr.rel (0) target = $region29
    $region28: #{tpu_custom_call.1} parent=1 // pred_region
      _
    $region29: #{tpu_custom_call.1} parent=1 // pred_fallthru
      _
    // Predicated region
    $region30: #{tpu_custom_call.1} parent=1 // pred_check
      _
    $region31: #{tpu_custom_call.1} parent=1 // pred_check_branch
      %322 = sbr.rel (0) target = $region33
    $region32: #{tpu_custom_call.1} parent=1 // pred_region
      _
    $region33: #{tpu_custom_call.1} parent=1 // pred_fallthru
      _
    // Predicated region
    $region34: #{tpu_custom_call.1} parent=1 // pred_check
      _
    $region35: #{tpu_custom_call.1} parent=1 // pred_check_branch
      %324 = sbr.rel (0) target = $region37
    $region36: #{tpu_custom_call.1} parent=1 // pred_region
      _
    $region37: #{tpu_custom_call.1} parent=1 // pred_fallthru
      _
    // Predicated region
    $region38: #{tpu_custom_call.1} parent=1 // pred_check
      _
    $region39: #{tpu_custom_call.1} parent=1 // pred_check_branch
      %326 = sbr.rel (0) target = $region41
    $region40: #{tpu_custom_call.1} parent=1 // pred_region
      _
    $region41: #{tpu_custom_call.1} parent=1 // pred_fallthru
      _
    %327 = vsyncpa [#allocation4], 1

</llo_original>
